<compile_context>
chip_gen: v6e
topology: v6e:2x2x1
jax: 0.10.0
libtpu: 0.0.40
codegen_flags: <defaults>
</compile_context>

<pallas_src>
import functools

import jax
import jax.numpy as jnp
from jax.experimental import pallas as pl
from jax.experimental.pallas import tpu as pltpu


POSE_PAD = 128                      # lane-dense padded width of fused fc2/fc3
_MIB = 1024 * 1024
_PIPELINE_VMEM_BUDGET = 28 * _MIB   # working-set cap; fits v5e/v6e/v7x scoped VMEM


def _round_up(v, m):
    return ((v + m - 1) // m) * m


# -----------------------------------------------------------------------------
# Kernels
# -----------------------------------------------------------------------------
def _head_compute(x_ref, w1_ref, b1_ref, w23_ref, b23_ref):
    """Shared body: avg-pool -> fc1 -> ReLU -> fused (fc2 | fc3) projection."""
    hw = x_ref.shape[-1]
    # AdaptiveAvgPool2d(1) + flatten(start_dim=1): f32-accumulating reduction
    # over the spatial (last / lane) axis of the (nb, C, HW) tile. No full-tile
    # f32 copy is materialized, so bf16 feature streams stay narrow.
    pooled = jnp.sum(x_ref[...], axis=-1, dtype=jnp.float32) * (1.0 / hw)

    # fc1 + ReLU. Dropout p=0.1 is identity at inference.
    # TODO(synk): training-mode dropout (stochastic masking) not implemented.
    h = jnp.dot(pooled.astype(w1_ref.dtype), w1_ref[...],
                preferred_element_type=jnp.float32)
    h = jnp.maximum(h + b1_ref[...].astype(jnp.float32), 0.0)

    # Fused fc2 (->3) / fc3 (->4), zero-padded to 128 output lanes.
    # Columns 0:3 are p_x, 3:7 are p_q == torch.cat((p_x, p_q), dim=1).
    pose = jnp.dot(h.astype(w23_ref.dtype), w23_ref[...],
                   preferred_element_type=jnp.float32)
    pose = pose + b23_ref[...].astype(jnp.float32)
    return h, pose


def posenet_head_kernel(x_ref, w1_ref, b1_ref, w23_ref, b23_ref, pose_ref):
    _, pose = _head_compute(x_ref, w1_ref, b1_ref, w23_ref, b23_ref)
    pose_ref[...] = pose.astype(pose_ref.dtype)


def posenet_head_kernel_feat(x_ref, w1_ref, b1_ref, w23_ref, b23_ref,
                             pose_ref, feat_ref):
    h, pose = _head_compute(x_ref, w1_ref, b1_ref, w23_ref, b23_ref)
    pose_ref[...] = pose.astype(pose_ref.dtype)
    feat_ref[...] = h.astype(feat_ref.dtype)   # feature_map_posenet


# -----------------------------------------------------------------------------
# Parameters
# -----------------------------------------------------------------------------
def init_posenet_params(key, backbone_dim, latent_dim):
    """Deterministic init matching the PyTorch module's __init__ shapes.

    Linear weights use kaiming_normal_ (std = sqrt(2 / fan_in)); biases use the
    PyTorch Linear default uniform(-1/sqrt(fan_in), 1/sqrt(fan_in)).
    Weights are stored transposed (in, out) so the kernel does x @ W.
    """
    k1, k2, k3, k4, k5, k6 = jax.random.split(key, 6)
    w1 = jax.random.normal(k1, (backbone_dim, latent_dim), jnp.float32) * jnp.sqrt(
        2.0 / backbone_dim)
    b1 = jax.random.uniform(k2, (1, latent_dim), jnp.float32,
                            -1.0 / jnp.sqrt(backbone_dim), 1.0 / jnp.sqrt(backbone_dim))
    w2 = jax.random.normal(k3, (latent_dim, 3), jnp.float32) * jnp.sqrt(2.0 / latent_dim)
    b2 = jax.random.uniform(k4, (1, 3), jnp.float32,
                            -1.0 / jnp.sqrt(latent_dim), 1.0 / jnp.sqrt(latent_dim))
    w3 = jax.random.normal(k5, (latent_dim, 4), jnp.float32) * jnp.sqrt(2.0 / latent_dim)
    b3 = jax.random.uniform(k6, (1, 4), jnp.float32,
                            -1.0 / jnp.sqrt(latent_dim), 1.0 / jnp.sqrt(latent_dim))
    return {"w1": w1, "b1": b1, "w2": w2, "b2": b2, "w3": w3, "b3": b3}


def prepare_posenet_params(params, weight_dtype=jnp.bfloat16):
    """One-time parameter prep (hoisted out of the forward pass):
    fuse fc2/fc3 into a single zero-padded 128-lane projection and cast the
    matmul weights to bf16 (native MXU path; biases stay f32)."""
    w23 = jnp.concatenate([params["w2"], params["w3"]], axis=1)   # (L, 7)
    b23 = jnp.concatenate([params["b2"], params["b3"]], axis=1)   # (1, 7)
    L = params["w1"].shape[1]
    w23p = jnp.zeros((L, POSE_PAD), jnp.float32).at[:, :7].set(w23)
    b23p = jnp.zeros((1, POSE_PAD), jnp.float32).at[:, :7].set(b23)
    return {
        "w1": params["w1"].astype(weight_dtype),
        "b1": params["b1"].astype(jnp.float32),
        "w23p": w23p.astype(weight_dtype),
        "b23p": b23p.astype(jnp.float32),
    }


# -----------------------------------------------------------------------------
# Forward
# -----------------------------------------------------------------------------
@functools.partial(jax.jit,
                   static_argnames=("return_feature", "batch_block", "feature_dtype"))
def posenet_forward(img_features, prepped, return_feature=False,
                    batch_block=128, feature_dtype=jnp.bfloat16):
    """img_features: (N, C, H, W) backbone feature map (NCHW, like PyTorch).

    The feature map may be bf16 (recommended — halves the dominant HBM read);
    pooling and matmuls accumulate in f32 inside the kernel.
    """
    N, C, H, W = img_features.shape
    HW = H * W
    L = prepped["w1"].shape[1]

    # Contiguous, metadata-only reshape: NCHW -> (N, C, HW). No transpose and
    # no extra HBM round trip; spatial pooling happens inside the kernel.
    x = img_features.reshape(N, C, HW)

    x_bytes = jnp.dtype(x.dtype).itemsize
    w_bytes = jnp.dtype(prepped["w1"].dtype).itemsize
    feat_bytes = jnp.dtype(feature_dtype).itemsize

    # ---- batch-tile sizing (VMEM-budget aware) ------------------------------
    row_vmem = _round_up(C, 8) * _round_up(HW, 128) * x_bytes   # padded x row
    weights_vmem = (C * L + L * POSE_PAD) * w_bytes + (L + POSE_PAD) * 4

    def vmem_need(nb_):
        need = 2 * nb_ * row_vmem                       # double-buffered x tile
        need += weights_vmem                            # single resident copy
        need += 2 * _round_up(nb_, 8) * POSE_PAD * 4    # double-buffered pose out
        if return_feature:
            need += 2 * _round_up(nb_, 8) * _round_up(L, 128) * feat_bytes
        return need

    if N < 16:
        nb = N                                          # single full-batch block
    else:
        nb = max(8, (min(batch_block, N) // 8) * 8)
        while nb > 8 and vmem_need(nb) > _PIPELINE_VMEM_BUDGET:
            nb -= 8
        # Keep >= 2 grid steps so v7x can shard batch blocks across both
        # TensorCores via dimension_semantics=("parallel",).
        if pl.cdiv(N, nb) < 2:
            nb = max(8, _round_up(pl.cdiv(N, 2), 8))
    grid = (pl.cdiv(N, nb),)

    vmem_limit = int(min(max(vmem_need(nb) + 8 * _MIB, 32 * _MIB), 48 * _MIB))

    cost = pl.CostEstimate(
        flops=N * C * HW + 2 * N * C * L + 2 * N * L * POSE_PAD,
        transcendentals=0,
        bytes_accessed=(N * C * HW * x_bytes                       # feature map
                        + (C * L + L * POSE_PAD) * w_bytes         # weights
                        + (L + POSE_PAD) * 4                       # biases
                        + N * POSE_PAD * 4                         # pose out
                        + (N * L * feat_bytes if return_feature else 0)),
    )

    # x: tiled over batch -> double-buffered / pipelined DMA; partial final
    # block is masked by Pallas (no wrapper-side padding copy).
    x_spec = pl.BlockSpec((nb, C, HW), lambda i: (i, 0, 0))
    # Weights/biases: whole array, one VMEM-resident copy (no per-step re-DMA,
    # no double buffering).
    resident = pl.BlockSpec(memory_space=pltpu.MemorySpace.VMEM)
    in_specs = [x_spec, resident, resident, resident, resident]
    pose_spec = pl.BlockSpec((nb, POSE_PAD), lambda i: (i, 0))
    compiler_params = pltpu.CompilerParams(
        dimension_semantics=("parallel",),      # batch blocks are independent
        vmem_limit_bytes=vmem_limit,
    )
    args = (x, prepped["w1"], prepped["b1"], prepped["w23p"], prepped["b23p"])

    if return_feature:
        pose_padded, feat = pl.pallas_call(
            posenet_head_kernel_feat,
            out_shape=(jax.ShapeDtypeStruct((N, POSE_PAD), jnp.float32),
                       jax.ShapeDtypeStruct((N, L), feature_dtype)),
            grid=grid,
            in_specs=in_specs,
            out_specs=(pose_spec, pl.BlockSpec((nb, L), lambda i: (i, 0))),
            compiler_params=compiler_params,
            cost_estimate=cost,
        )(*args)
        return {"pose": pose_padded[:, :7], "feature_map_posenet": feat}

    pose_padded = pl.pallas_call(
        posenet_head_kernel,
        out_shape=jax.ShapeDtypeStruct((N, POSE_PAD), jnp.float32),
        grid=grid,
        in_specs=in_specs,
        out_specs=pose_spec,
        compiler_params=compiler_params,
        cost_estimate=cost,
    )(*args)
    return {"pose": pose_padded[:, :7]}


# -----------------------------------------------------------------------------
# Reference + self-test
# -----------------------------------------------------------------------------
def _reference_forward(img_features, params):
    """Pure-JAX f32 reference for a correctness check."""
    N, C, H, W = img_features.shape
    pooled = jnp.mean(img_features.astype(jnp.float32).reshape(N, C, H * W), axis=-1)
    h = jax.nn.relu(pooled @ params["w1"] + params["b1"])
    p_x = h @ params["w2"] + params["b2"]
    p_q = h @ params["w3"] + params["b3"]
    return jnp.concatenate([p_x, p_q], axis=1), h


if __name__ == "__main__":
    # Small shapes consistent with the module's head structure
    # (real model: backbone_dim=1280, latent_dim=2048, HW=49).
    C, H, W = 128, 8, 8
    LATENT = 256

    key = jax.random.PRNGKey(0)
    k_params, k_x1, k_x2 = jax.random.split(key, 3)
    params = init_posenet_params(k_params, backbone_dim=C, latent_dim=LATENT)
    prepped = prepare_posenet_params(params)          # bf16 matmul weights

    # bf16 weights/feature output vs f32 reference -> relaxed tolerance.
    TOL = dict(atol=2e-2, rtol=2e-2)

    # --- Case 1: small batch (single block), return_feature=True ------------
    N1 = 2
    x1 = jax.random.normal(k_x1, (N1, C, H, W), jnp.float32)
    out1 = posenet_forward(x1, prepped, return_feature=True)
    pose1 = jax.block_until_ready(out1["pose"])
    feat1 = jax.block_until_ready(out1["feature_map_posenet"])
    ref_pose1, ref_feat1 = _reference_forward(x1, params)
    assert pose1.shape == (N1, 7), pose1.shape
    assert feat1.shape == (N1, LATENT), feat1.shape
    assert jnp.allclose(pose1, ref_pose1, **TOL), "pose mismatch (case 1)"
    assert jnp.allclose(feat1.astype(jnp.float32), ref_feat1, **TOL), \
        "feature mismatch (case 1)"

    # --- Case 2: batch tiled over the grid, partial final block (N=20, nb=8) -
    N2 = 20
    x2 = jax.random.normal(k_x2, (N2, C, H, W), jnp.float32)
    out2 = posenet_forward(x2, prepped, return_feature=False, batch_block=8)
    pose2 = jax.block_until_ready(out2["pose"])
    ref_pose2, _ = _reference_forward(x2, params)
    assert pose2.shape == (N2, 7), pose2.shape
    assert jnp.allclose(pose2, ref_pose2, **TOL), "pose mismatch (case 2)"

    print("KERNEL_OK")
</pallas_src>

<mosaic_0001>
module attributes {stable_mosaic.version = 11 : i64} {
  func.func @posenet_head_kernel_feat(%arg0: i32, %arg1: memref<2x128x64xf32, #tpu.memory_space<vmem>>, %arg2: memref<128x256xbf16, #tpu.memory_space<vmem>>, %arg3: memref<1x256xf32, #tpu.memory_space<vmem>>, %arg4: memref<256x128xbf16, #tpu.memory_space<vmem>>, %arg5: memref<1x128xf32, #tpu.memory_space<vmem>>, %arg6: memref<2x128xf32, #tpu.memory_space<vmem>>, %arg7: memref<2x256xbf16, #tpu.memory_space<vmem>>) attributes {dimension_semantics = [#tpu.dimension_semantics<parallel>], iteration_bounds = array<i64: 1>, scalar_prefetch = 0 : i64, scratch_operands = 0 : i64, tpu.core_type = #tpu.core_type<tc>, window_params = [{transform_indices = @transform_0, window_bounds = array<i64: 2, 128, 64>}, {pipeline_mode = #tpu.pipeline_mode<synchronous>, transform_indices = @transform_1, window_bounds = array<i64: 128, 256>}, {pipeline_mode = #tpu.pipeline_mode<synchronous>, transform_indices = @transform_2, window_bounds = array<i64: 1, 256>}, {pipeline_mode = #tpu.pipeline_mode<synchronous>, transform_indices = @transform_3, window_bounds = array<i64: 256, 128>}, {pipeline_mode = #tpu.pipeline_mode<synchronous>, transform_indices = @transform_4, window_bounds = array<i64: 1, 128>}, {transform_indices = @transform_5, window_bounds = array<i64: 2, 128>}, {transform_indices = @transform_6, window_bounds = array<i64: 2, 256>}]} {
    %c0 = arith.constant 0 : index
    %c0_0 = arith.constant 0 : index
    %c0_1 = arith.constant 0 : index
    %0 = vector.load %arg1[%c0, %c0_0, %c0_1] : memref<2x128x64xf32, #tpu.memory_space<vmem>>, vector<2x128x64xf32>
    %cst = arith.constant dense<0.000000e+00> : vector<2x128xf32>
    %1 = vector.multi_reduction <add>, %0, %cst [2] : vector<2x128x64xf32> to vector<2x128xf32>
    %cst_2 = arith.constant 1.562500e-02 : f32
    %2 = vector.broadcast %cst_2 : f32 to vector<2x128xf32>
    %3 = arith.mulf %1, %2 : vector<2x128xf32>
    %4 = arith.truncf %3 : vector<2x128xf32> to vector<2x128xbf16>
    %c0_3 = arith.constant 0 : index
    %c0_4 = arith.constant 0 : index
    %5 = vector.load %arg2[%c0_3, %c0_4] : memref<128x256xbf16, #tpu.memory_space<vmem>>, vector<128x256xbf16>
    %cst_5 = arith.constant dense<0.000000e+00> : vector<2x256xf32>
    %6 = tpu.matmul %4, %5, %cst_5 {dimension_numbers = #tpu.dot_dimension_numbers<[1], [0], [0], [1], [0, 0, 1, 1], [], []>} : vector<2x128xbf16>, vector<128x256xbf16>, vector<2x256xf32> -> vector<2x256xf32>
    %c0_6 = arith.constant 0 : index
    %c0_7 = arith.constant 0 : index
    %7 = vector.load %arg3[%c0_6, %c0_7] : memref<1x256xf32, #tpu.memory_space<vmem>>, vector<1x256xf32>
    %8 = vector.broadcast %7 : vector<1x256xf32> to vector<2x256xf32>
    %9 = arith.addf %6, %8 : vector<2x256xf32>
    %cst_8 = arith.constant 0.000000e+00 : f32
    %10 = vector.broadcast %cst_8 : f32 to vector<2x256xf32>
    %11 = arith.maximumf %9, %10 : vector<2x256xf32>
    %12 = arith.truncf %11 : vector<2x256xf32> to vector<2x256xbf16>
    %c0_9 = arith.constant 0 : index
    %c0_10 = arith.constant 0 : index
    %13 = vector.load %arg4[%c0_9, %c0_10] : memref<256x128xbf16, #tpu.memory_space<vmem>>, vector<256x128xbf16>
    %cst_11 = arith.constant dense<0.000000e+00> : vector<2x128xf32>
    %14 = tpu.matmul %12, %13, %cst_11 {dimension_numbers = #tpu.dot_dimension_numbers<[1], [0], [0], [1], [0, 0, 1, 1], [], []>} : vector<2x256xbf16>, vector<256x128xbf16>, vector<2x128xf32> -> vector<2x128xf32>
    %c0_12 = arith.constant 0 : index
    %c0_13 = arith.constant 0 : index
    %15 = vector.load %arg5[%c0_12, %c0_13] : memref<1x128xf32, #tpu.memory_space<vmem>>, vector<1x128xf32>
    %16 = vector.broadcast %15 : vector<1x128xf32> to vector<2x128xf32>
    %17 = arith.addf %14, %16 : vector<2x128xf32>
    %c0_14 = arith.constant 0 : index
    %c0_15 = arith.constant 0 : index
    %18 = vector.load %arg6[%c0_14, %c0_15] : memref<2x128xf32, #tpu.memory_space<vmem>>, vector<2x128xf32>
    tpu.vector_store %arg6[%c0_14, %c0_15], %17 {strides = array<i32>} : memref<2x128xf32, #tpu.memory_space<vmem>>, vector<2x128xf32>,
    %19 = arith.truncf %11 : vector<2x256xf32> to vector<2x256xbf16>
    %c0_16 = arith.constant 0 : index
    %c0_17 = arith.constant 0 : index
    %20 = vector.load %arg7[%c0_16, %c0_17] : memref<2x256xbf16, #tpu.memory_space<vmem>>, vector<2x256xbf16>
    tpu.vector_store %arg7[%c0_16, %c0_17], %19 {strides = array<i32>} : memref<2x256xbf16, #tpu.memory_space<vmem>>, vector<2x256xbf16>,
    return
  }
  func.func @transform_0(%arg0: i32) -> (i32, i32, i32) {
    %c0_i32 = arith.constant 0 : i32
    %c0_i32_0 = arith.constant 0 : i32
    %c0_i32_1 = arith.constant 0 : i32
    return %arg0, %c0_i32, %c0_i32_0 : i32, i32, i32
  }
  func.func @transform_1(%arg0: i32) -> (i32, i32) {
    %c0_i32 = arith.constant 0 : i32
    %c0_i32_0 = arith.constant 0 : i32
    %c0_i32_1 = arith.constant 0 : i32
    return %c0_i32, %c0_i32_0 : i32, i32
  }
  func.func @transform_2(%arg0: i32) -> (i32, i32) {
    %c0_i32 = arith.constant 0 : i32
    %c0_i32_0 = arith.constant 0 : i32
    %c0_i32_1 = arith.constant 0 : i32
    return %c0_i32, %c0_i32_0 : i32, i32
  }
  func.func @transform_3(%arg0: i32) -> (i32, i32) {
    %c0_i32 = arith.constant 0 : i32
    %c0_i32_0 = arith.constant 0 : i32
    %c0_i32_1 = arith.constant 0 : i32
    return %c0_i32, %c0_i32_0 : i32, i32
  }
  func.func @transform_4(%arg0: i32) -> (i32, i32) {
    %c0_i32 = arith.constant 0 : i32
    %c0_i32_0 = arith.constant 0 : i32
    %c0_i32_1 = arith.constant 0 : i32
    return %c0_i32, %c0_i32_0 : i32, i32
  }
  func.func @transform_5(%arg0: i32) -> (i32, i32) {
    %c0_i32 = arith.constant 0 : i32
    %c0_i32_0 = arith.constant 0 : i32
    return %arg0, %c0_i32 : i32, i32
  }
  func.func @transform_6(%arg0: i32) -> (i32, i32) {
    %c0_i32 = arith.constant 0 : i32
    %c0_i32_0 = arith.constant 0 : i32
    return %arg0, %c0_i32 : i32, i32
  }
}

</mosaic_0001>

<llo_original>
// kernel: posenet_forward.1
$region0: #{posenet_forward.1}
  #allocation0 [shape = 'u32[]', space=smem, size = 0x4, offset = 0x4, fixed_abs, tag = 'smem constant byte address 0x4 - core index']
  #allocation1 [shape = 'u32[144,128]{1,0:T(1,128)}', space=vmem, size = 0x12000, scoped, tag = 'internal scratch']
  %s0 = inlined_call_operand.vmem [shape: f32[2,128,64], index: 0, kind: input, shape index: {}]
  %s1 = inlined_call_operand.vmem [shape: bf16[128,256], index: 1, kind: input, shape index: {}]
  %s2 = inlined_call_operand.vmem [shape: f32[1,256], index: 2, kind: input, shape index: {}]
  %s3 = inlined_call_operand.vmem [shape: bf16[256,128], index: 3, kind: input, shape index: {}]
  %s4 = inlined_call_operand.vmem [shape: f32[1,128], index: 4, kind: input, shape index: {}]
  %s5 = inlined_call_operand.hbm [shape: f32[2,128], index: 5, kind: output, shape index: {0}]
  %s6 = inlined_call_operand.hbm [shape: bf16[2,256], index: 6, kind: output, shape index: {1}]
  %7 = xla_tuple %s5, %s6
  %s8 = sld [smem:[#allocation0]]
  $region38: #{posenet_forward.1} parent=0
    _
  %s10 = ssub.s32 1, %s8
  %s11 = scalar_select 0, %s10, %s8
  $region1: #{posenet_forward.1} parent=0
    #allocation2 [shape = 'u8[1024]{0}', space=vmem, size = 0x400, scoped, tag = 'output window, operand 0, single buffered']
    #allocation3 [shape = 's32[1]{0}', space=sflag, size = 0x4, scoped, tag = 'scoped memory for posenet_forward.1']
    #allocation4 [shape = 'u8[1024]{0}', space=vmem, size = 0x400, scoped, tag = 'output window, operand 1, single buffered']
    #allocation5 [shape = 's32[1]{0}', space=sflag, size = 0x4, scoped, tag = 'scoped memory for posenet_forward.1']
    %12 = vsyncpa [#allocation3], 0
    %13 = vsyncpa [#allocation5], 0
    // Predicated region
    $region2: #{posenet_forward.1} parent=1 // pred_check
      _
    $region3: #{posenet_forward.1} parent=1 // pred_check_branch
      %15 = sbr.rel (0) target = $region5
    $region4: #{posenet_forward.1} parent=1 // pred_region
      _
    $region5: #{posenet_forward.1} parent=1 // pred_fallthru
      _
    // Predicated region
    $region6: #{posenet_forward.1} parent=1 // pred_check
      _
    $region7: #{posenet_forward.1} parent=1 // pred_check_branch
      %17 = sbr.rel (0) target = $region9
    $region8: #{posenet_forward.1} parent=1 // pred_region
      _
    $region9: #{posenet_forward.1} parent=1 // pred_fallthru
      _
    // Predicated region
    $region10: #{posenet_forward.1} parent=1 // pred_check
      _
    $region11: #{posenet_forward.1} parent=1 // pred_check_branch
      %19 = sbr.rel (0) target = $region13
    $region12: #{posenet_forward.1} parent=1 // pred_region
      _
    $region13: #{posenet_forward.1} parent=1 // pred_fallthru
      _
    // Predicated region
    $region14: #{posenet_forward.1} parent=1 // pred_check
      _
    $region15: #{posenet_forward.1} parent=1 // pred_check_branch
      %21 = sbr.rel (0) target = $region17
    $region16: #{posenet_forward.1} parent=1 // pred_region
      _
    $region17: #{posenet_forward.1} parent=1 // pred_fallthru
      _
    // Predicated region
    $region18: #{posenet_forward.1} parent=1 // pred_check
      _
    $region19: #{posenet_forward.1} parent=1 // pred_check_branch
      %23 = sbr.rel (0) target = $region21
    $region20: #{posenet_forward.1} parent=1 // pred_region
      _
    $region21: #{posenet_forward.1} parent=1 // pred_fallthru
      _
    %v25 = vld [vmem:[%s0] sm:$0xff]
    %v26 = vld [vmem:[%s0 + $0x8] sm:$0xff]
    %v27 = vld [vmem:[%s0 + $0x10] sm:$0xff]
    %v28 = vld [vmem:[%s0 + $0x18] sm:$0xff]
    %v29 = vld [vmem:[%s0 + $0x20] sm:$0xff]
    %v30 = vld [vmem:[%s0 + $0x28] sm:$0xff]
    %v31 = vld [vmem:[%s0 + $0x30] sm:$0xff]
    %v32 = vld [vmem:[%s0 + $0x38] sm:$0xff]
    %v33 = vld [vmem:[%s0 + $0x40] sm:$0xff]
    %v34 = vld [vmem:[%s0 + $0x48] sm:$0xff]
    %v35 = vld [vmem:[%s0 + $0x50] sm:$0xff]
    %v36 = vld [vmem:[%s0 + $0x58] sm:$0xff]
    %v37 = vld [vmem:[%s0 + $0x60] sm:$0xff]
    %v38 = vld [vmem:[%s0 + $0x68] sm:$0xff]
    %v39 = vld [vmem:[%s0 + $0x70] sm:$0xff]
    %v40 = vld [vmem:[%s0 + $0x78] sm:$0xff]
    %v41 = vld [vmem:[%s0 + $0x80] sm:$0xff]
    %v42 = vld [vmem:[%s0 + $0x88] sm:$0xff]
    %v43 = vld [vmem:[%s0 + $0x90] sm:$0xff]
    %v44 = vld [vmem:[%s0 + $0x98] sm:$0xff]
    %v45 = vld [vmem:[%s0 + $0xa0] sm:$0xff]
    %v46 = vld [vmem:[%s0 + $0xa8] sm:$0xff]
    %v47 = vld [vmem:[%s0 + $0xb0] sm:$0xff]
    %v48 = vld [vmem:[%s0 + $0xb8] sm:$0xff]
    %v49 = vld [vmem:[%s0 + $0xc0] sm:$0xff]
    %v50 = vld [vmem:[%s0 + $0xc8] sm:$0xff]
    %v51 = vld [vmem:[%s0 + $0xd0] sm:$0xff]
    %v52 = vld [vmem:[%s0 + $0xd8] sm:$0xff]
    %v53 = vld [vmem:[%s0 + $0xe0] sm:$0xff]
    %v54 = vld [vmem:[%s0 + $0xe8] sm:$0xff]
    %v55 = vld [vmem:[%s0 + $0xf0] sm:$0xff]
    %v56 = vld [vmem:[%s0 + $0xf8] sm:$0xff]
    %vm57 = vcmask 523264
    %v58 = vsel %vm57, %v25, 0.0
    %59 = vadd.xlane.f32.xlu0 %v58
    %v60 = vpop.xlane.xlu0 %59
    %v61 = vsel %vm57, %v26, 0.0
    %62 = vadd.xlane.f32.xlu0 %v61
    %v63 = vpop.xlane.xlu0 %62
    %v64 = vsel %vm57, %v27, 0.0
    %65 = vadd.xlane.f32.xlu0 %v64
    %v66 = vpop.xlane.xlu0 %65
    %v67 = vsel %vm57, %v28, 0.0
    %68 = vadd.xlane.f32.xlu0 %v67
    %v69 = vpop.xlane.xlu0 %68
    %v70 = vsel %vm57, %v29, 0.0
    %71 = vadd.xlane.f32.xlu0 %v70
    %v72 = vpop.xlane.xlu0 %71
    %v73 = vsel %vm57, %v30, 0.0
    %74 = vadd.xlane.f32.xlu0 %v73
    %v75 = vpop.xlane.xlu0 %74
    %v76 = vsel %vm57, %v31, 0.0
    %77 = vadd.xlane.f32.xlu0 %v76
    %v78 = vpop.xlane.xlu0 %77
    %v79 = vsel %vm57, %v32, 0.0
    %80 = vadd.xlane.f32.xlu0 %v79
    %v81 = vpop.xlane.xlu0 %80
    %v82 = vsel %vm57, %v33, 0.0
    %83 = vadd.xlane.f32.xlu0 %v82
    %v84 = vpop.xlane.xlu0 %83
    %v85 = vsel %vm57, %v34, 0.0
    %86 = vadd.xlane.f32.xlu0 %v85
    %v87 = vpop.xlane.xlu0 %86
    %v88 = vsel %vm57, %v35, 0.0
    %89 = vadd.xlane.f32.xlu0 %v88
    %v90 = vpop.xlane.xlu0 %89
    %v91 = vsel %vm57, %v36, 0.0
    %92 = vadd.xlane.f32.xlu0 %v91
    %v93 = vpop.xlane.xlu0 %92
    %v94 = vsel %vm57, %v37, 0.0
    %95 = vadd.xlane.f32.xlu0 %v94
    %v96 = vpop.xlane.xlu0 %95
    %v97 = vsel %vm57, %v38, 0.0
    %98 = vadd.xlane.f32.xlu0 %v97
    %v99 = vpop.xlane.xlu0 %98
    %v100 = vsel %vm57, %v39, 0.0
    %101 = vadd.xlane.f32.xlu0 %v100
    %v102 = vpop.xlane.xlu0 %101
    %v103 = vsel %vm57, %v40, 0.0
    %104 = vadd.xlane.f32.xlu0 %v103
    %v105 = vpop.xlane.xlu0 %104
    %v106 = vsel %vm57, %v41, 0.0
    %107 = vadd.xlane.f32.xlu0 %v106
    %v108 = vpop.xlane.xlu0 %107
    %v109 = vsel %vm57, %v42, 0.0
    %110 = vadd.xlane.f32.xlu0 %v109
    %v111 = vpop.xlane.xlu0 %110
    %v112 = vsel %vm57, %v43, 0.0
    %113 = vadd.xlane.f32.xlu0 %v112
    %v114 = vpop.xlane.xlu0 %113
    %v115 = vsel %vm57, %v44, 0.0
    %116 = vadd.xlane.f32.xlu0 %v115
    %v117 = vpop.xlane.xlu0 %116
    %v118 = vsel %vm57, %v45, 0.0
    %119 = vadd.xlane.f32.xlu0 %v118
    %v120 = vpop.xlane.xlu0 %119
    %v121 = vsel %vm57, %v46, 0.0
    %122 = vadd.xlane.f32.xlu0 %v121
    %v123 = vpop.xlane.xlu0 %122
    %v124 = vsel %vm57, %v47, 0.0
    %125 = vadd.xlane.f32.xlu0 %v124
    %v126 = vpop.xlane.xlu0 %125
    %v127 = vsel %vm57, %v48, 0.0
    %128 = vadd.xlane.f32.xlu0 %v127
    %v129 = vpop.xlane.xlu0 %128
    %v130 = vsel %vm57, %v49, 0.0
    %131 = vadd.xlane.f32.xlu0 %v130
    %v132 = vpop.xlane.xlu0 %131
    %v133 = vsel %vm57, %v50, 0.0
    %134 = vadd.xlane.f32.xlu0 %v133
    %v135 = vpop.xlane.xlu0 %134
    %v136 = vsel %vm57, %v51, 0.0
    %137 = vadd.xlane.f32.xlu0 %v136
    %v138 = vpop.xlane.xlu0 %137
    %v139 = vsel %vm57, %v52, 0.0
    %140 = vadd.xlane.f32.xlu0 %v139
    %v141 = vpop.xlane.xlu0 %140
    %v142 = vsel %vm57, %v53, 0.0
    %143 = vadd.xlane.f32.xlu0 %v142
    %v144 = vpop.xlane.xlu0 %143
    %v145 = vsel %vm57, %v54, 0.0
    %146 = vadd.xlane.f32.xlu0 %v145
    %v147 = vpop.xlane.xlu0 %146
    %v148 = vsel %vm57, %v55, 0.0
    %149 = vadd.xlane.f32.xlu0 %v148
    %v150 = vpop.xlane.xlu0 %149
    %v151 = vsel %vm57, %v56, 0.0
    %152 = vadd.xlane.f32.xlu0 %v151
    %v153 = vpop.xlane.xlu0 %152
    %v154 = vmul.f32 %v60, 0.015625
    %v155 = vmul.f32 %v63, 0.015625
    %v156 = vmul.f32 %v66, 0.015625
    %v157 = vmul.f32 %v69, 0.015625
    %v158 = vmul.f32 %v72, 0.015625
    %v159 = vmul.f32 %v75, 0.015625
    %v160 = vmul.f32 %v78, 0.015625
    %v161 = vmul.f32 %v81, 0.015625
    %v162 = vmul.f32 %v84, 0.015625
    %v163 = vmul.f32 %v87, 0.015625
    %v164 = vmul.f32 %v90, 0.015625
    %v165 = vmul.f32 %v93, 0.015625
    %v166 = vmul.f32 %v96, 0.015625
    %v167 = vmul.f32 %v99, 0.015625
    %v168 = vmul.f32 %v102, 0.015625
    %v169 = vmul.f32 %v105, 0.015625
    %v170 = vmul.f32 %v108, 0.015625
    %v171 = vmul.f32 %v111, 0.015625
    %v172 = vmul.f32 %v114, 0.015625
    %v173 = vmul.f32 %v117, 0.015625
    %v174 = vmul.f32 %v120, 0.015625
    %v175 = vmul.f32 %v123, 0.015625
    %v176 = vmul.f32 %v126, 0.015625
    %v177 = vmul.f32 %v129, 0.015625
    %v178 = vmul.f32 %v132, 0.015625
    %v179 = vmul.f32 %v135, 0.015625
    %v180 = vmul.f32 %v138, 0.015625
    %v181 = vmul.f32 %v141, 0.015625
    %v182 = vmul.f32 %v144, 0.015625
    %v183 = vmul.f32 %v147, 0.015625
    %v184 = vmul.f32 %v150, 0.015625
    %v185 = vmul.f32 %v153, 0.015625
    %v186 = vpack.c.bf16 %v155, %v154
    %v187 = vpack.c.bf16 %v157, %v156
    %v188 = vpack.c.bf16 %v159, %v158
    %v189 = vpack.c.bf16 %v161, %v160
    %v190 = vpack.c.bf16 %v163, %v162
    %v191 = vpack.c.bf16 %v165, %v164
    %v192 = vpack.c.bf16 %v167, %v166
    %v193 = vpack.c.bf16 %v169, %v168
    %v194 = vpack.c.bf16 %v171, %v170
    %v195 = vpack.c.bf16 %v173, %v172
    %v196 = vpack.c.bf16 %v175, %v174
    %v197 = vpack.c.bf16 %v177, %v176
    %v198 = vpack.c.bf16 %v179, %v178
    %v199 = vpack.c.bf16 %v181, %v180
    %v200 = vpack.c.bf16 %v183, %v182
    %v201 = vpack.c.bf16 %v185, %v184
    %v202 = vld [vmem:[%s1] sm:$0xff]
    %v203 = vld [vmem:[%s1 + $0x8] sm:$0xff]
    %v204 = vld [vmem:[%s1 + $0x10] sm:$0xff]
    %v205 = vld [vmem:[%s1 + $0x18] sm:$0xff]
    %v206 = vld [vmem:[%s1 + $0x20] sm:$0xff]
    %v207 = vld [vmem:[%s1 + $0x28] sm:$0xff]
    %v208 = vld [vmem:[%s1 + $0x30] sm:$0xff]
    %v209 = vld [vmem:[%s1 + $0x38] sm:$0xff]
    %v210 = vld [vmem:[%s1 + $0x40] sm:$0xff]
    %v211 = vld [vmem:[%s1 + $0x48] sm:$0xff]
    %v212 = vld [vmem:[%s1 + $0x50] sm:$0xff]
    %v213 = vld [vmem:[%s1 + $0x58] sm:$0xff]
    %v214 = vld [vmem:[%s1 + $0x60] sm:$0xff]
    %v215 = vld [vmem:[%s1 + $0x68] sm:$0xff]
    %v216 = vld [vmem:[%s1 + $0x70] sm:$0xff]
    %v217 = vld [vmem:[%s1 + $0x78] sm:$0xff]
    %v218 = vld [vmem:[%s2] sm:$0x3]
    %v220 = vlaneseq
    %v221 = vshrl.u32 %v220, 7
    %v222 = vsub.s32 0, %v221
    %v223 = vrot.slane %v218, %v222
    %v224 = vlaneseq
    %v225 = vshrl.u32 %v224, 7
    %v226 = vsub.s32 1, %v225
    %v227 = vrot.slane %v218, %v226
    %v246 = vunpack.c.l.b16 %v186
    %v247 = vunpack.c.h.b16 %v186
    %v248 = vunpack.c.l.b16 %v187
    %v249 = vunpack.c.h.b16 %v187
    %v250 = vunpack.c.l.b16 %v188
    %v251 = vunpack.c.h.b16 %v188
    %v252 = vunpack.c.l.b16 %v189
    %v253 = vunpack.c.h.b16 %v189
    %v254 = vunpack.c.l.b16 %v190
    %v255 = vunpack.c.h.b16 %v190
    %v256 = vunpack.c.l.b16 %v191
    %v257 = vunpack.c.h.b16 %v191
    %v258 = vunpack.c.l.b16 %v192
    %v259 = vunpack.c.h.b16 %v192
    %v260 = vunpack.c.l.b16 %v193
    %v261 = vunpack.c.h.b16 %v193
    %v262 = vunpack.c.l.b16 %v194
    %v263 = vunpack.c.h.b16 %v194
    %v264 = vunpack.c.l.b16 %v195
    %v265 = vunpack.c.h.b16 %v195
    %v266 = vunpack.c.l.b16 %v196
    %v267 = vunpack.c.h.b16 %v196
    %v268 = vunpack.c.l.b16 %v197
    %v269 = vunpack.c.h.b16 %v197
    %v270 = vunpack.c.l.b16 %v198
    %v271 = vunpack.c.h.b16 %v198
    %v272 = vunpack.c.l.b16 %v199
    %v273 = vunpack.c.h.b16 %v199
    %v274 = vunpack.c.l.b16 %v200
    %v275 = vunpack.c.h.b16 %v200
    %v276 = vunpack.c.l.b16 %v201
    %v277 = vunpack.c.h.b16 %v201
    %v278 = vlaneseq
    %v279 = vand.u32 %v278, 127
    %v280 = vlaneseq
    %v281 = vshrl.u32 %v280, 7
    %v282 = vsub.s32 %v279, %v281
    %v283 = vrot.slane %v246, %v282
    %v284 = vadd.s32 %v279, 4294967288
    %v285 = vlaneseq
    %v286 = vshrl.u32 %v285, 7
    %v287 = vsub.s32 %v284, %v286
    %v288 = vrot.slane %v247, %v287
    %vm289 = vcmask 130112
    %v290 = vsel %vm289, %v288, %v283
    %v291 = vadd.s32 %v279, 4294967280
    %v292 = vlaneseq
    %v293 = vshrl.u32 %v292, 7
    %v294 = vsub.s32 %v291, %v293
    %v295 = vrot.slane %v248, %v294
    %vm296 = vcmask 195712
    %v297 = vsel %vm296, %v295, %v290
    %v298 = vadd.s32 %v279, 4294967272
    %v299 = vlaneseq
    %v300 = vshrl.u32 %v299, 7
    %v301 = vsub.s32 %v298, %v300
    %v302 = vrot.slane %v249, %v301
    %vm303 = vcmask 261312
    %v304 = vsel %vm303, %v302, %v297
    %v305 = vadd.s32 %v279, 4294967264
    %v306 = vlaneseq
    %v307 = vshrl.u32 %v306, 7
    %v308 = vsub.s32 %v305, %v307
    %v309 = vrot.slane %v250, %v308
    %vm310 = vcmask 326912
    %v311 = vsel %vm310, %v309, %v304
    %v312 = vadd.s32 %v279, 4294967256
    %v313 = vlaneseq
    %v314 = vshrl.u32 %v313, 7
    %v315 = vsub.s32 %v312, %v314
    %v316 = vrot.slane %v251, %v315
    %vm317 = vcmask 392512
    %v318 = vsel %vm317, %v316, %v311
    %v319 = vadd.s32 %v279, 4294967248
    %v320 = vlaneseq
    %v321 = vshrl.u32 %v320, 7
    %v322 = vsub.s32 %v319, %v321
    %v323 = vrot.slane %v252, %v322
    %vm324 = vcmask 458112
    %v325 = vsel %vm324, %v323, %v318
    %v326 = vadd.s32 %v279, 4294967240
    %v327 = vlaneseq
    %v328 = vshrl.u32 %v327, 7
    %v329 = vsub.s32 %v326, %v328
    %v330 = vrot.slane %v253, %v329
    %vm331 = vcmask 523712
    %v332 = vsel %vm331, %v330, %v325
    %v333 = vadd.s32 %v279, 4294967232
    %v334 = vlaneseq
    %v335 = vshrl.u32 %v334, 7
    %v336 = vsub.s32 %v333, %v335
    %v337 = vrot.slane %v254, %v336
    %vm338 = vcmask 589312
    %v339 = vsel %vm338, %v337, %v332
    %v340 = vadd.s32 %v279, 4294967224
    %v341 = vlaneseq
    %v342 = vshrl.u32 %v341, 7
    %v343 = vsub.s32 %v340, %v342
    %v344 = vrot.slane %v255, %v343
    %vm345 = vcmask 654912
    %v346 = vsel %vm345, %v344, %v339
    %v347 = vadd.s32 %v279, 4294967216
    %v348 = vlaneseq
    %v349 = vshrl.u32 %v348, 7
    %v350 = vsub.s32 %v347, %v349
    %v351 = vrot.slane %v256, %v350
    %vm352 = vcmask 720512
    %v353 = vsel %vm352, %v351, %v346
    %v354 = vadd.s32 %v279, 4294967208
    %v355 = vlaneseq
    %v356 = vshrl.u32 %v355, 7
    %v357 = vsub.s32 %v354, %v356
    %v358 = vrot.slane %v257, %v357
    %vm359 = vcmask 786112
    %v360 = vsel %vm359, %v358, %v353
    %v361 = vadd.s32 %v279, 4294967200
    %v362 = vlaneseq
    %v363 = vshrl.u32 %v362, 7
    %v364 = vsub.s32 %v361, %v363
    %v365 = vrot.slane %v258, %v364
    %vm366 = vcmask 851712
    %v367 = vsel %vm366, %v365, %v360
    %v368 = vadd.s32 %v279, 4294967192
    %v369 = vlaneseq
    %v370 = vshrl.u32 %v369, 7
    %v371 = vsub.s32 %v368, %v370
    %v372 = vrot.slane %v259, %v371
    %vm373 = vcmask 917312
    %v374 = vsel %vm373, %v372, %v367
    %v375 = vadd.s32 %v279, 4294967184
    %v376 = vlaneseq
    %v377 = vshrl.u32 %v376, 7
    %v378 = vsub.s32 %v375, %v377
    %v379 = vrot.slane %v260, %v378
    %vm380 = vcmask 982912
    %v381 = vsel %vm380, %v379, %v374
    %v382 = vadd.s32 %v279, 4294967176
    %v383 = vlaneseq
    %v384 = vshrl.u32 %v383, 7
    %v385 = vsub.s32 %v382, %v384
    %v386 = vrot.slane %v261, %v385
    %vm387 = vcmask 1048512
    %v388 = vsel %vm387, %v386, %v381
    %v389 = vlaneseq
    %v390 = vshrl.u32 %v389, 7
    %v391 = vsub.s32 %v279, %v390
    %v392 = vrot.slane %v262, %v391
    %v393 = vlaneseq
    %v394 = vshrl.u32 %v393, 7
    %v395 = vsub.s32 %v284, %v394
    %v396 = vrot.slane %v263, %v395
    %v397 = vsel %vm289, %v396, %v392
    %v398 = vlaneseq
    %v399 = vshrl.u32 %v398, 7
    %v400 = vsub.s32 %v291, %v399
    %v401 = vrot.slane %v264, %v400
    %v402 = vsel %vm296, %v401, %v397
    %v403 = vlaneseq
    %v404 = vshrl.u32 %v403, 7
    %v405 = vsub.s32 %v298, %v404
    %v406 = vrot.slane %v265, %v405
    %v407 = vsel %vm303, %v406, %v402
    %v408 = vlaneseq
    %v409 = vshrl.u32 %v408, 7
    %v410 = vsub.s32 %v305, %v409
    %v411 = vrot.slane %v266, %v410
    %v412 = vsel %vm310, %v411, %v407
    %v413 = vlaneseq
    %v414 = vshrl.u32 %v413, 7
    %v415 = vsub.s32 %v312, %v414
    %v416 = vrot.slane %v267, %v415
    %v417 = vsel %vm317, %v416, %v412
    %v418 = vlaneseq
    %v419 = vshrl.u32 %v418, 7
    %v420 = vsub.s32 %v319, %v419
    %v421 = vrot.slane %v268, %v420
    %v422 = vsel %vm324, %v421, %v417
    %v423 = vlaneseq
    %v424 = vshrl.u32 %v423, 7
    %v425 = vsub.s32 %v326, %v424
    %v426 = vrot.slane %v269, %v425
    %v427 = vsel %vm331, %v426, %v422
    %v428 = vlaneseq
    %v429 = vshrl.u32 %v428, 7
    %v430 = vsub.s32 %v333, %v429
    %v431 = vrot.slane %v270, %v430
    %v432 = vsel %vm338, %v431, %v427
    %v433 = vlaneseq
    %v434 = vshrl.u32 %v433, 7
    %v435 = vsub.s32 %v340, %v434
    %v436 = vrot.slane %v271, %v435
    %v437 = vsel %vm345, %v436, %v432
    %v438 = vlaneseq
    %v439 = vshrl.u32 %v438, 7
    %v440 = vsub.s32 %v347, %v439
    %v441 = vrot.slane %v272, %v440
    %v442 = vsel %vm352, %v441, %v437
    %v443 = vlaneseq
    %v444 = vshrl.u32 %v443, 7
    %v445 = vsub.s32 %v354, %v444
    %v446 = vrot.slane %v273, %v445
    %v447 = vsel %vm359, %v446, %v442
    %v448 = vlaneseq
    %v449 = vshrl.u32 %v448, 7
    %v450 = vsub.s32 %v361, %v449
    %v451 = vrot.slane %v274, %v450
    %v452 = vsel %vm366, %v451, %v447
    %v453 = vlaneseq
    %v454 = vshrl.u32 %v453, 7
    %v455 = vsub.s32 %v368, %v454
    %v456 = vrot.slane %v275, %v455
    %v457 = vsel %vm373, %v456, %v452
    %v458 = vlaneseq
    %v459 = vshrl.u32 %v458, 7
    %v460 = vsub.s32 %v375, %v459
    %v461 = vrot.slane %v276, %v460
    %v462 = vsel %vm380, %v461, %v457
    %v463 = vlaneseq
    %v464 = vshrl.u32 %v463, 7
    %v465 = vsub.s32 %v382, %v464
    %v466 = vrot.slane %v277, %v465
    %v467 = vsel %vm387, %v466, %v462
    %vm468 = vcmask 1041409
    %v469 = vsel %vm468, %v467, %v388
    %v470 = vpack.c.b16 %v469, %v469
    %v488 = vunpack.c.l.b16 %v202
    %v489 = vunpack.c.h.b16 %v202
    %v490 = vunpack.c.l.b16 %v203
    %v491 = vunpack.c.h.b16 %v203
    %v492 = vunpack.c.l.b16 %v204
    %v493 = vunpack.c.h.b16 %v204
    %v494 = vunpack.c.l.b16 %v205
    %v495 = vunpack.c.h.b16 %v205
    %v496 = vunpack.c.l.b16 %v206
    %v497 = vunpack.c.h.b16 %v206
    %v498 = vunpack.c.l.b16 %v207
    %v499 = vunpack.c.h.b16 %v207
    %v500 = vunpack.c.l.b16 %v208
    %v501 = vunpack.c.h.b16 %v208
    %v502 = vunpack.c.l.b16 %v209
    %v503 = vunpack.c.h.b16 %v209
    %v504 = vunpack.c.l.b16 %v210
    %v505 = vunpack.c.h.b16 %v210
    %v506 = vunpack.c.l.b16 %v211
    %v507 = vunpack.c.h.b16 %v211
    %v508 = vunpack.c.l.b16 %v212
    %v509 = vunpack.c.h.b16 %v212
    %v510 = vunpack.c.l.b16 %v213
    %v511 = vunpack.c.h.b16 %v213
    %v512 = vunpack.c.l.b16 %v214
    %v513 = vunpack.c.h.b16 %v214
    %v514 = vunpack.c.l.b16 %v215
    %v515 = vunpack.c.h.b16 %v215
    %v516 = vunpack.c.l.b16 %v216
    %v517 = vunpack.c.h.b16 %v216
    %v518 = vunpack.c.l.b16 %v217
    %v519 = vunpack.c.h.b16 %v217
    %v520 = vpack.c.b16 %v490, %v488
    %v521 = vpack.c.b16 %v491, %v489
    %v522 = vpack.c.b16 %v494, %v492
    %v523 = vpack.c.b16 %v495, %v493
    %v524 = vpack.c.b16 %v498, %v496
    %v525 = vpack.c.b16 %v499, %v497
    %v526 = vpack.c.b16 %v502, %v500
    %v527 = vpack.c.b16 %v503, %v501
    %v528 = vpack.c.b16 %v506, %v504
    %v529 = vpack.c.b16 %v507, %v505
    %v530 = vpack.c.b16 %v510, %v508
    %v531 = vpack.c.b16 %v511, %v509
    %v532 = vpack.c.b16 %v514, %v512
    %v533 = vpack.c.b16 %v515, %v513
    %v534 = vpack.c.b16 %v518, %v516
    %v535 = vpack.c.b16 %v519, %v517
    %552 = vmatprep.subr.bf16.mxu0 %v535
    %553 = vmatpush1.bf16.msra.mxu0 %v534
    %554 = vmatprep.subr.bf16.mxu0 %v533
    %555 = vmatpush1.bf16.msra.mxu0 %v532
    %556 = vmatprep.subr.bf16.mxu0 %v531
    %557 = vmatpush1.bf16.msra.mxu0 %v530
    %558 = vmatprep.subr.bf16.mxu0 %v529
    %559 = vmatpush1.bf16.msra.mxu0 %v528
    %560 = vmatprep.subr.bf16.mxu0 %v527
    %561 = vmatpush1.bf16.msra.mxu0 %v526
    %562 = vmatprep.subr.bf16.mxu0 %v525
    %563 = vmatpush1.bf16.msra.mxu0 %v524
    %564 = vmatprep.subr.bf16.mxu0 %v523
    %565 = vmatpush1.bf16.msra.mxu0 %v522
    %566 = vmatprep.subr.bf16.mxu0 %v521
    %567 = vmatpush1.bf16.msra.mxu0 %v520
    %568 = vmatprep.subr.bf16.mxu0 0
    %569 = vmatpush2.bf16.msra.mxu0 0
    %570 = vmatprep.subr.bf16.mxu0 0
    %571 = vmatpush2.bf16.msra.mxu0 0
    %572 = vmatprep.subr.bf16.mxu0 0
    %573 = vmatpush2.bf16.msra.mxu0 0
    %574 = vmatprep.subr.bf16.mxu0 0
    %575 = vmatpush2.bf16.msra.mxu0 0
    %576 = vmatprep.subr.bf16.mxu0 0
    %577 = vmatpush2.bf16.msra.mxu0 0
    %578 = vmatprep.subr.bf16.mxu0 0
    %579 = vmatpush2.bf16.msra.mxu0 0
    %580 = vmatprep.subr.bf16.mxu0 0
    %581 = vmatpush2.bf16.msra.mxu0 0
    %582 = vmatprep.subr.bf16.mxu0 0
    %583 = vmatpush2.bf16.msra.mxu0 0
    %584 = vmatprep.mubr.bf16.mxu0 0
    %585 = vmatmul.mubr.bf16.gmra.mxu0 %v470
    %v586 = vpop.f32.mrf.mxu0
    %v587 = vadd.f32 %v223, %v586
    %v588 = vpop.f32.mrf.mxu0
    %v589 = vadd.f32 %v227, %v588
    %v590 = vpop.f32.mrf.mxu0
    %v591 = vpop.f32.mrf.mxu0
    %592 = vdwg.mxu0
    %v593 = vmax.f32 %v587, 0.0
    %v594 = vmax.f32 %v589, 0.0
    %v595 = vpack.c.bf16 %v593, %v593
    %v596 = vpack.c.bf16 %v594, %v594
    %v597 = vld [vmem:[%s3] sm:$0xf]
    %v598 = vld [vmem:[%s3 + $0x4] sm:$0xf]
    %v599 = vld [vmem:[%s3 + $0x8] sm:$0xf]
    %v600 = vld [vmem:[%s3 + $0xc] sm:$0xf]
    %v601 = vld [vmem:[%s3 + $0x10] sm:$0xf]
    %v602 = vld [vmem:[%s3 + $0x14] sm:$0xf]
    %v603 = vld [vmem:[%s3 + $0x18] sm:$0xf]
    %v604 = vld [vmem:[%s3 + $0x1c] sm:$0xf]
    %v605 = vld [vmem:[%s3 + $0x20] sm:$0xf]
    %v606 = vld [vmem:[%s3 + $0x24] sm:$0xf]
    %v607 = vld [vmem:[%s3 + $0x28] sm:$0xf]
    %v608 = vld [vmem:[%s3 + $0x2c] sm:$0xf]
    %v609 = vld [vmem:[%s3 + $0x30] sm:$0xf]
    %v610 = vld [vmem:[%s3 + $0x34] sm:$0xf]
    %v611 = vld [vmem:[%s3 + $0x38] sm:$0xf]
    %v612 = vld [vmem:[%s3 + $0x3c] sm:$0xf]
    %v613 = vld [vmem:[%s3 + $0x40] sm:$0xf]
    %v614 = vld [vmem:[%s3 + $0x44] sm:$0xf]
    %v615 = vld [vmem:[%s3 + $0x48] sm:$0xf]
    %v616 = vld [vmem:[%s3 + $0x4c] sm:$0xf]
    %v617 = vld [vmem:[%s3 + $0x50] sm:$0xf]
    %v618 = vld [vmem:[%s3 + $0x54] sm:$0xf]
    %v619 = vld [vmem:[%s3 + $0x58] sm:$0xf]
    %v620 = vld [vmem:[%s3 + $0x5c] sm:$0xf]
    %v621 = vld [vmem:[%s3 + $0x60] sm:$0xf]
    %v622 = vld [vmem:[%s3 + $0x64] sm:$0xf]
    %v623 = vld [vmem:[%s3 + $0x68] sm:$0xf]
    %v624 = vld [vmem:[%s3 + $0x6c] sm:$0xf]
    %v625 = vld [vmem:[%s3 + $0x70] sm:$0xf]
    %v626 = vld [vmem:[%s3 + $0x74] sm:$0xf]
    %v627 = vld [vmem:[%s3 + $0x78] sm:$0xf]
    %v628 = vld [vmem:[%s3 + $0x7c] sm:$0xf]
    %v629 = vld [vmem:[%s4] sm:$0x1]
    %v631 = vlaneseq
    %v632 = vshrl.u32 %v631, 7
    %v633 = vsub.s32 0, %v632
    %v634 = vrot.slane %v629, %v633
    %v668 = vunpack.c.l.b16 %v597
    %v669 = vunpack.c.l.b16 %v598
    %v670 = vunpack.c.l.b16 %v599
    %v671 = vunpack.c.l.b16 %v600
    %v672 = vunpack.c.l.b16 %v601
    %v673 = vunpack.c.l.b16 %v602
    %v674 = vunpack.c.l.b16 %v603
    %v675 = vunpack.c.l.b16 %v604
    %v676 = vunpack.c.l.b16 %v605
    %v677 = vunpack.c.l.b16 %v606
    %v678 = vunpack.c.l.b16 %v607
    %v679 = vunpack.c.l.b16 %v608
    %v680 = vunpack.c.l.b16 %v609
    %v681 = vunpack.c.l.b16 %v610
    %v682 = vunpack.c.l.b16 %v611
    %v683 = vunpack.c.l.b16 %v612
    %v684 = vunpack.c.l.b16 %v613
    %v685 = vunpack.c.l.b16 %v614
    %v686 = vunpack.c.l.b16 %v615
    %v687 = vunpack.c.l.b16 %v616
    %v688 = vunpack.c.l.b16 %v617
    %v689 = vunpack.c.l.b16 %v618
    %v690 = vunpack.c.l.b16 %v619
    %v691 = vunpack.c.l.b16 %v620
    %v692 = vunpack.c.l.b16 %v621
    %v693 = vunpack.c.l.b16 %v622
    %v694 = vunpack.c.l.b16 %v623
    %v695 = vunpack.c.l.b16 %v624
    %v696 = vunpack.c.l.b16 %v625
    %v697 = vunpack.c.l.b16 %v626
    %v698 = vunpack.c.l.b16 %v627
    %v699 = vunpack.c.l.b16 %v628
    %v700 = vpack.c.b16 %v669, %v668
    %v701 = vpack.c.b16 %v671, %v670
    %v702 = vpack.c.b16 %v673, %v672
    %v703 = vpack.c.b16 %v675, %v674
    %v704 = vpack.c.b16 %v677, %v676
    %v705 = vpack.c.b16 %v679, %v678
    %v706 = vpack.c.b16 %v681, %v680
    %v707 = vpack.c.b16 %v683, %v682
    %v708 = vpack.c.b16 %v685, %v684
    %v709 = vpack.c.b16 %v687, %v686
    %v710 = vpack.c.b16 %v689, %v688
    %v711 = vpack.c.b16 %v691, %v690
    %v712 = vpack.c.b16 %v693, %v692
    %v713 = vpack.c.b16 %v695, %v694
    %v714 = vpack.c.b16 %v697, %v696
    %v715 = vpack.c.b16 %v699, %v698
    %732 = vmatprep.subr.bf16.mxu0 0
    %733 = vmatpush1.bf16.msra.mxu0 %v707
    %734 = vmatprep.subr.bf16.mxu0 0
    %735 = vmatpush1.bf16.msra.mxu0 %v706
    %736 = vmatprep.subr.bf16.mxu0 0
    %737 = vmatpush1.bf16.msra.mxu0 %v705
    %738 = vmatprep.subr.bf16.mxu0 0
    %739 = vmatpush1.bf16.msra.mxu0 %v704
    %740 = vmatprep.subr.bf16.mxu0 0
    %741 = vmatpush1.bf16.msra.mxu0 %v703
    %742 = vmatprep.subr.bf16.mxu0 0
    %743 = vmatpush1.bf16.msra.mxu0 %v702
    %744 = vmatprep.subr.bf16.mxu0 0
    %745 = vmatpush1.bf16.msra.mxu0 %v701
    %746 = vmatprep.subr.bf16.mxu0 0
    %747 = vmatpush1.bf16.msra.mxu0 %v700
    %748 = vmatprep.subr.bf16.mxu0 0
    %749 = vmatpush2.bf16.msra.mxu0 %v715
    %750 = vmatprep.subr.bf16.mxu0 0
    %751 = vmatpush2.bf16.msra.mxu0 %v714
    %752 = vmatprep.subr.bf16.mxu0 0
    %753 = vmatpush2.bf16.msra.mxu0 %v713
    %754 = vmatprep.subr.bf16.mxu0 0
    %755 = vmatpush2.bf16.msra.mxu0 %v712
    %756 = vmatprep.subr.bf16.mxu0 0
    %757 = vmatpush2.bf16.msra.mxu0 %v711
    %758 = vmatprep.subr.bf16.mxu0 0
    %759 = vmatpush2.bf16.msra.mxu0 %v710
    %760 = vmatprep.subr.bf16.mxu0 0
    %761 = vmatpush2.bf16.msra.mxu0 %v709
    %762 = vmatprep.subr.bf16.mxu0 0
    %763 = vmatpush2.bf16.msra.mxu0 %v708
    %764 = vmatprep.mubr.bf16.mxu0 %v596
    %765 = vmatmul.mubr.bf16.gmra.mxu0 %v595
    %v766 = vpop.f32.mrf.mxu0
    %v767 = vadd.f32 %v634, %v766
    %v768 = vpop.f32.mrf.mxu0
    %v769 = vpop.f32.mrf.mxu0
    %v770 = vpop.f32.mrf.mxu0
    %771 = vdwg.mxu0
    %772 = vst [vmem:[#allocation2] sm:$0x3] %v767
    %v775 = vcombine.low %v595, %v596
    %v777 = vunpack.c.l.s4 1966171168
    %v778 = vunpack.c.0.s8 %v777
    %v779 = vlaneseq
    %v780 = vshrl.u32 %v779, 7
    %v781 = vsub.s32 %v778, %v780
    %v782 = vrot.slane %v775, %v781
    %v784 = vunpack.c.l.s4 1966171168
    %v785 = vunpack.c.0.s8 %v784
    %v786 = vlaneseq
    %v787 = vshrl.u32 %v786, 7
    %v788 = vsub.s32 %v785, %v787
    %v789 = vrot.slane %v782, %v788
    %791 = vst [vmem:[#allocation4] sm:$0x3] %v789
    // Predicated region
    $region22: #{posenet_forward.1} parent=1 // pred_check
      _
    $region23: #{posenet_forward.1} parent=1 // pred_check_branch
      %793 = sbr.rel (0) target = $region25
    $region24: #{posenet_forward.1} parent=1 // pred_region
      %s795 = ssub.s32 32, 32
      %796 = vsyncadd [#allocation3], %s795
      %s798 = sshll.u32 [#allocation2], 4
      %s799 = int_to_ptr.vmem [resolvable:$true] %s798
      %801 = dma.vmem_to_hbm [thread:$0]  %s799, 32, %s5, [#allocation3]
    $region25: #{posenet_forward.1} parent=1 // pred_fallthru
      _
    // Predicated region
    $region26: #{posenet_forward.1} parent=1 // pred_check
      _
    $region27: #{posenet_forward.1} parent=1 // pred_check_branch
      %803 = sbr.rel (0) target = $region29
    $region28: #{posenet_forward.1} parent=1 // pred_region
      %s805 = ssub.s32 32, 32
      %806 = vsyncadd [#allocation5], %s805
      %s808 = sshll.u32 [#allocation4], 4
      %s809 = int_to_ptr.vmem [resolvable:$true] %s808
      %811 = dma.vmem_to_hbm [thread:$0]  %s809, 32, %s6, [#allocation5]
    $region29: #{posenet_forward.1} parent=1 // pred_fallthru
      _
    // Predicated region
    $region30: #{posenet_forward.1} parent=1 // pred_check
      _
    $region31: #{posenet_forward.1} parent=1 // pred_check_branch
      %813 = sbr.rel (0) target = $region33
    $region32: #{posenet_forward.1} parent=1 // pred_region
      %814 = dma.done [#allocation3], 32
    $region33: #{posenet_forward.1} parent=1 // pred_fallthru
      _
    // Predicated region
    $region34: #{posenet_forward.1} parent=1 // pred_check
      _
    $region35: #{posenet_forward.1} parent=1 // pred_check_branch
      %816 = sbr.rel (0) target = $region37
    $region36: #{posenet_forward.1} parent=1 // pred_region
      %817 = dma.done [#allocation5], 32
    $region37: #{posenet_forward.1} parent=1 // pred_fallthru
      _
    %818 = vsyncpa [#allocation3], 1
    %819 = vsyncpa [#allocation5], 1

</llo_original>
